<compile_context>
chip_gen: v7x
topology: tpu7x:2x2x1
jax: 0.10.0
libtpu: 0.0.40
codegen_flags: <defaults>
</compile_context>

<pallas_src>
import jax
import jax.numpy as jnp
from jax.experimental import pallas as pl
from jax.experimental.pallas import tpu as pltpu

_LANE = 128
_MAX_TILE_B = 4096


def _round_up(x, m):
    return ((x + m - 1) // m) * m


def _tpu_vmem_bytes():
    """Per-TensorCore VMEM capacity; conservative fallback if unqueryable."""
    try:
        info = pltpu.get_tpu_info()
        cap = getattr(info, "vmem_capacity_bytes", None)
        if cap:
            return int(cap)
    except Exception:
        pass
    return 64 * 1024 * 1024   # v7x per-TC size: safe lower bound on all gens


# ---------------------------------------------------------------------------
# Kernels
# ---------------------------------------------------------------------------

def _linear_kernel_resident(x_ref, wt_ref, b_ref, o_ref):
    """Single K step (W^T fully resident): o = x @ W^T + b, no scratch."""
    x = x_ref[...]
    if x.dtype != wt_ref.dtype:           # in-kernel cast (no extra HBM pass)
        x = x.astype(wt_ref.dtype)
    acc = jnp.dot(x, wt_ref[...], preferred_element_type=jnp.float32)
    o_ref[...] = (acc + b_ref[...]).astype(o_ref.dtype)


def _linear_kernel_ktiled(x_ref, wt_ref, b_ref, o_ref, acc_ref):
    """K-tiled path (large input_size): accumulate in f32 VMEM scratch."""
    k = pl.program_id(1)

    @pl.when(k == 0)
    def _init():
        acc_ref[...] = jnp.zeros_like(acc_ref)

    x = x_ref[...]
    if x.dtype != wt_ref.dtype:
        x = x.astype(wt_ref.dtype)
    acc_ref[...] += jnp.dot(x, wt_ref[...], preferred_element_type=jnp.float32)

    @pl.when(k == pl.num_programs(1) - 1)
    def _finalize():
        o_ref[...] = (acc_ref[...] + b_ref[...]).astype(o_ref.dtype)


# ---------------------------------------------------------------------------
# Parameter prep (hoisted out of the per-forward path)
# ---------------------------------------------------------------------------

def prepare_params(weight, bias, *, compute_dtype=None, force_tile_k=None):
    """One-time prep: W -> (D[_pad], C_pad) W^T, bias -> f32 (1, C_pad).

    weight: (num_classes, input_size);  bias: (num_classes,)
    compute_dtype: optional low-precision dtype for W^T (x is cast in-kernel).
    force_tile_k: testing hook to force the K-tiled kernel (multiple of 128).
    """
    C, D = weight.shape
    C_pad = _round_up(max(C, _LANE), _LANE)
    w_dtype = compute_dtype if compute_dtype is not None else weight.dtype
    w_itemsize = jnp.dtype(w_dtype).itemsize

    vmem_cap = _tpu_vmem_bytes()
    weight_budget = vmem_cap // 4   # resident-W^T budget: ~16 MiB v7x, ~32 MiB v5e/v6e

    if force_tile_k is not None:
        tile_k = int(force_tile_k)
        assert tile_k % _LANE == 0
        D_pad = _round_up(D, tile_k)
    elif D * C_pad * w_itemsize <= weight_budget:
        tile_k = D                  # fully resident W^T, single K step, no D padding
        D_pad = D
    else:
        # Pad D only to the next 128 multiple (not tile_k) and pick a tile_k
        # that divides it -> at most 127 wasted zero columns.
        D_pad = _round_up(D, _LANE)
        tile_k = next(t for t in (512, 256, 128) if D_pad % t == 0)

    wt = weight.T.astype(w_dtype)
    if (D_pad != D) or (C_pad != C):
        wt_full = jnp.zeros((D_pad, C_pad), w_dtype).at[:D, :C].set(wt)
    else:
        wt_full = wt
    b_pad = jnp.zeros((1, C_pad), jnp.float32).at[0, :C].set(bias.astype(jnp.float32))

    return {
        "wt": wt_full,               # (D_pad, C_pad)
        "b": b_pad,                  # (1, C_pad) f32
        "tile_k": tile_k,
        "kt": D_pad // tile_k,
        "num_classes": C,
        "input_size": D,
    }


# ---------------------------------------------------------------------------
# Tiling heuristics
# ---------------------------------------------------------------------------

def _choose_tile_b(batch, tile_k, c_pad, kt, x_isz, w_isz, o_isz,
                   vmem_budget_bytes, row_mult, two_tc):
    # Batch-independent VMEM: weight tile(s) + bias.
    if kt == 1:
        fixed = tile_k * c_pad * w_isz          # resident W^T, single buffer
    else:
        fixed = 2 * tile_k * c_pad * w_isz      # double-buffered W^T tiles
    fixed += c_pad * 4                          # bias (f32, single buffer)
    # Per batch row: 2x x buffers + 2x out buffers (+ f32 acc if K-tiled).
    per_row = 2 * tile_k * x_isz + 2 * c_pad * o_isz
    if kt > 1:
        per_row += c_pad * 4

    avail = max(vmem_budget_bytes - fixed, per_row * row_mult)
    tile_b = max(row_mult, min(int(avail // per_row), _MAX_TILE_B))
    tile_b = (tile_b // row_mult) * row_mult
    # Never larger than the biggest row_mult-aligned slab inside the batch
    # (the remainder goes through the plain-jnp tail path).
    tile_b = min(tile_b, max(row_mult, (batch // row_mult) * row_mult))
    # Only on 2-TensorCore chips (v7x): prefer >=2 batch programs so the
    # "parallel" axis shards across cores.  On v5e/v6e (1 TC) the grid is a
    # serial loop, so halving would only add per-step overhead.
    if two_tc and (batch // tile_b) < 2 and tile_b > row_mult:
        tile_b = max(row_mult, ((tile_b // 2) // row_mult) * row_mult)
    return int(tile_b)


# ---------------------------------------------------------------------------
# Forward
# ---------------------------------------------------------------------------

def logistic_regression_forward(x, params, *, tile_b=None):
    """x: (B, input_size) -> logits (B, num_classes)."""
    B, D = x.shape
    assert D == params["input_size"]
    wt = params["wt"]
    b = params["b"]
    tile_k = params["tile_k"]
    kt = params["kt"]
    C = params["num_classes"]
    D_pad, C_pad = wt.shape
    out_dtype = x.dtype

    # Generation-aware VMEM budgets (v5e/v6e: 128 MiB -> ~96 MiB limit;
    # v7x: 64 MiB -> ~48 MiB limit).
    vmem_cap = _tpu_vmem_bytes()
    vmem_limit = (vmem_cap * 3) // 4
    vmem_budget = max(vmem_limit - (8 << 20), 16 << 20)
    two_tc = vmem_cap <= (64 << 20)   # proxy: v7x has 64 MiB/TC and 2 TCs

    low_prec = (jnp.dtype(wt.dtype).itemsize < 4) or (jnp.dtype(x.dtype).itemsize < 4)
    row_mult = 16 if low_prec else 8

    if tile_b is None:
        tile_b = _choose_tile_b(B, tile_k, C_pad, kt,
                                jnp.dtype(x.dtype).itemsize,
                                jnp.dtype(wt.dtype).itemsize,
                                jnp.dtype(out_dtype).itemsize,
                                vmem_budget, row_mult, two_tc)
    else:
        # Validate/round user-provided tile_b to the sublane packing multiple.
        tile_b = max(row_mult, (int(tile_b) // row_mult) * row_mult)

    B_main = (B // tile_b) * tile_b
    parts = []

    if B_main > 0:
        grid_b = B_main // tile_b
        if kt == 1:
            # Resident-weight fast path: full x passed as-is (zero copy); the
            # grid only covers the first B_main rows.
            out_main = pl.pallas_call(
                _linear_kernel_resident,
                out_shape=jax.ShapeDtypeStruct((B_main, C_pad), out_dtype),
                grid_spec=pltpu.PrefetchScalarGridSpec(
                    num_scalar_prefetch=0,
                    grid=(grid_b,),
                    in_specs=[
                        pl.BlockSpec((tile_b, D), lambda i: (i, 0)),       # x tile
                        pl.BlockSpec((D, C_pad), lambda i: (0, 0),
                                     pipeline_mode=pl.Buffered(1)),        # W^T resident
                        pl.BlockSpec((1, C_pad), lambda i: (0, 0),
                                     pipeline_mode=pl.Buffered(1)),        # bias resident
                    ],
                    out_specs=pl.BlockSpec((tile_b, C_pad), lambda i: (i, 0)),
                ),
                compiler_params=pltpu.CompilerParams(
                    dimension_semantics=("parallel",),
                    vmem_limit_bytes=int(vmem_limit),
                ),
            )(x, wt, b)
        else:
            x_main = x
            if D_pad != D:
                # Rare path: large D not a multiple of tile_k -> pad the
                # reduction dim once (main rows only).
                x_main = jnp.pad(x[:B_main], ((0, 0), (0, D_pad - D)))
            out_main = pl.pallas_call(
                _linear_kernel_ktiled,
                out_shape=jax.ShapeDtypeStruct((B_main, C_pad), out_dtype),
                grid_spec=pltpu.PrefetchScalarGridSpec(
                    num_scalar_prefetch=0,
                    grid=(grid_b, kt),
                    in_specs=[
                        pl.BlockSpec((tile_b, tile_k), lambda i, k: (i, k)),   # x tile
                        pl.BlockSpec((tile_k, C_pad), lambda i, k: (k, 0)),    # W^T tile
                        pl.BlockSpec((1, C_pad), lambda i, k: (0, 0),
                                     pipeline_mode=pl.Buffered(1)),            # bias
                    ],
                    out_specs=pl.BlockSpec((tile_b, C_pad), lambda i, k: (i, 0)),
                    scratch_shapes=[pltpu.VMEM((tile_b, C_pad), jnp.float32)],
                ),
                compiler_params=pltpu.CompilerParams(
                    dimension_semantics=("parallel", "arbitrary"),
                    vmem_limit_bytes=int(vmem_limit),
                ),
            )(x_main, wt, b)
        parts.append(out_main[:, :C])

    if B_main < B:
        # Tiny tail (< tile_b rows): plain jnp on the original rows, no padding.
        x_tail = x[B_main:]
        if x_tail.dtype != wt.dtype:
            x_tail = x_tail.astype(wt.dtype)
        tail = jnp.dot(x_tail, wt[:D, :], preferred_element_type=jnp.float32) + b
        parts.append(tail[:, :C].astype(out_dtype))

    return parts[0] if len(parts) == 1 else jnp.concatenate(parts, axis=0)


# ---------------------------------------------------------------------------
# Demo / self-test
# ---------------------------------------------------------------------------

if __name__ == "__main__":
    key = jax.random.PRNGKey(0)
    k_x, k_w, k_b, k_x2 = jax.random.split(key, 4)

    input_size = 32
    num_classes = 16

    # nn.Linear default init: U(-1/sqrt(in), 1/sqrt(in))
    bound = 1.0 / float(input_size) ** 0.5
    weight = jax.random.uniform(k_w, (num_classes, input_size),
                                minval=-bound, maxval=bound, dtype=jnp.float32)
    bias = jax.random.uniform(k_b, (num_classes,),
                              minval=-bound, maxval=bound, dtype=jnp.float32)
    params = prepare_params(weight, bias)

    # 1) Batch multiple of 8: whole batch through the resident-weight kernel.
    x = jax.random.normal(k_x, (8, input_size), dtype=jnp.float32)
    out = jax.block_until_ready(logistic_regression_forward(x, params))
    ref = x @ weight.T + bias
    assert out.shape == (8, num_classes)
    assert jnp.allclose(out, ref, atol=1e-5, rtol=1e-5)

    # 2) Ragged batch: main tile via Pallas + small plain-jnp tail (no x copy).
    x2 = jax.random.normal(k_x2, (13, input_size), dtype=jnp.float32)
    out2 = jax.block_until_ready(logistic_regression_forward(x2, params))
    ref2 = x2 @ weight.T + bias
    assert out2.shape == (13, num_classes)
    assert jnp.allclose(out2, ref2, atol=1e-5, rtol=1e-5)

    # 3) Exercise the K-tiled accumulator kernel at small shapes (forced).
    input_size3 = 256
    k_w3, k_b3, k_x3 = jax.random.split(jax.random.PRNGKey(1), 3)
    bound3 = 1.0 / float(input_size3) ** 0.5
    weight3 = jax.random.uniform(k_w3, (num_classes, input_size3),
                                 minval=-bound3, maxval=bound3, dtype=jnp.float32)
    bias3 = jax.random.uniform(k_b3, (num_classes,),
                               minval=-bound3, maxval=bound3, dtype=jnp.float32)
    params3 = prepare_params(weight3, bias3, force_tile_k=128)   # kt == 2
    x3 = jax.random.normal(k_x3, (16, input_size3), dtype=jnp.float32)
    out3 = jax.block_until_ready(logistic_regression_forward(x3, params3))
    ref3 = x3 @ weight3.T + bias3
    assert out3.shape == (16, num_classes)
    assert jnp.allclose(out3, ref3, atol=1e-4, rtol=1e-4)

    print("KERNEL_OK")
</pallas_src>

<mosaic_0001>
module attributes {stable_mosaic.version = 11 : i64} {
  func.func @_linear_kernel_resident(%arg0: i32, %arg1: memref<8x32xf32, #tpu.memory_space<vmem>>, %arg2: memref<32x128xf32, #tpu.memory_space<vmem>>, %arg3: memref<1x128xf32, #tpu.memory_space<vmem>>, %arg4: memref<8x128xf32, #tpu.memory_space<vmem>>) attributes {dimension_semantics = [#tpu.dimension_semantics<parallel>], iteration_bounds = array<i64: 1>, scalar_prefetch = 0 : i64, scratch_operands = 0 : i64, tpu.core_type = #tpu.core_type<tc>, window_params = [{transform_indices = @transform_0, window_bounds = array<i64: 8, 32>}, {pipeline_mode = #tpu.pipeline_mode<synchronous>, transform_indices = @transform_1, window_bounds = array<i64: 32, 128>}, {pipeline_mode = #tpu.pipeline_mode<synchronous>, transform_indices = @transform_2, window_bounds = array<i64: 1, 128>}, {transform_indices = @transform_3, window_bounds = array<i64: 8, 128>}]} {
    %c0 = arith.constant 0 : index
    %c0_0 = arith.constant 0 : index
    %0 = vector.load %arg1[%c0, %c0_0] : memref<8x32xf32, #tpu.memory_space<vmem>>, vector<8x32xf32>
    %c0_1 = arith.constant 0 : index
    %c0_2 = arith.constant 0 : index
    %1 = vector.load %arg2[%c0_1, %c0_2] : memref<32x128xf32, #tpu.memory_space<vmem>>, vector<32x128xf32>
    %cst = arith.constant dense<0.000000e+00> : vector<8x128xf32>
    %2 = tpu.matmul %0, %1, %cst {dimension_numbers = #tpu.dot_dimension_numbers<[1], [0], [0], [1], [0, 0, 1, 1], [], []>} : vector<8x32xf32>, vector<32x128xf32>, vector<8x128xf32> -> vector<8x128xf32>
    %c0_3 = arith.constant 0 : index
    %c0_4 = arith.constant 0 : index
    %3 = vector.load %arg3[%c0_3, %c0_4] : memref<1x128xf32, #tpu.memory_space<vmem>>, vector<1x128xf32>
    %4 = vector.broadcast %3 : vector<1x128xf32> to vector<8x128xf32>
    %5 = arith.addf %2, %4 : vector<8x128xf32>
    %c0_5 = arith.constant 0 : index
    %c0_6 = arith.constant 0 : index
    %6 = vector.load %arg4[%c0_5, %c0_6] : memref<8x128xf32, #tpu.memory_space<vmem>>, vector<8x128xf32>
    tpu.vector_store %arg4[%c0_5, %c0_6], %5 {strides = array<i32>} : memref<8x128xf32, #tpu.memory_space<vmem>>, vector<8x128xf32>,
    return
  }
  func.func @transform_0(%arg0: i32) -> (i32, i32) {
    %c0_i32 = arith.constant 0 : i32
    %c0_i32_0 = arith.constant 0 : i32
    return %arg0, %c0_i32 : i32, i32
  }
  func.func @transform_1(%arg0: i32) -> (i32, i32) {
    %c0_i32 = arith.constant 0 : i32
    %c0_i32_0 = arith.constant 0 : i32
    %c0_i32_1 = arith.constant 0 : i32
    return %c0_i32, %c0_i32_0 : i32, i32
  }
  func.func @transform_2(%arg0: i32) -> (i32, i32) {
    %c0_i32 = arith.constant 0 : i32
    %c0_i32_0 = arith.constant 0 : i32
    %c0_i32_1 = arith.constant 0 : i32
    return %c0_i32, %c0_i32_0 : i32, i32
  }
  func.func @transform_3(%arg0: i32) -> (i32, i32) {
    %c0_i32 = arith.constant 0 : i32
    %c0_i32_0 = arith.constant 0 : i32
    return %arg0, %c0_i32 : i32, i32
  }
}

</mosaic_0001>

<llo_original>
// kernel: tpu_custom_call.1
$region0: #{tpu_custom_call.1}
  #allocation0 [shape = 'u32[]', space=smem, size = 0x4, offset = 0x4, fixed_abs, tag = 'smem constant byte address 0x4 - core index']
  #allocation1 [shape = 'u32[144,128]{1,0:T(1,128)}', space=vmem, size = 0x12000, scoped, tag = 'internal scratch']
  %s0 = inlined_call_operand.hbm [shape: f32[8,32], index: 0, kind: input, shape index: {}]
  %s1 = inlined_call_operand.hbm [shape: f32[32,128], index: 1, kind: input, shape index: {}]
  %s2 = inlined_call_operand.vmem [shape: f32[1,128], index: 2, kind: input, shape index: {}]
  %s3 = inlined_call_operand.hbm [shape: f32[8,128], index: 3, kind: output, shape index: {}]
  %s4 = sld [smem:[#allocation0]]
  $region30: #{tpu_custom_call.1} parent=0
    _
  %s6 = ssub.s32 1, %s4
  %s7 = scalar_select 0, %s6, %s4
  $region1: #{tpu_custom_call.1} parent=0
    #allocation2 [shape = 'u8[4096]{0}', space=vmem, size = 0x1000, scoped, tag = 'input window, operand 0, single buffered']
    #allocation3 [shape = 's32[1]{0}', space=sflag, size = 0x4, scoped, tag = 'scoped memory for tpu_custom_call.1']
    #allocation4 [shape = 's32[1]{0}', space=sflag, size = 0x4, scoped, tag = 'scoped memory for tpu_custom_call.1']
    #allocation5 [shape = 'u8[16384]{0}', space=vmem, size = 0x4000, scoped, tag = 'input window, operand 1, single buffered']
    #allocation6 [shape = 's32[1]{0}', space=sflag, size = 0x4, scoped, tag = 'scoped memory for tpu_custom_call.1']
    #allocation7 [shape = 'u8[4096]{0}', space=vmem, size = 0x1000, scoped, tag = 'output window, operand 0, single buffered']
    %8 = vsyncpa [#allocation3], 0
    %9 = vsyncpa [#allocation6], 0
    %10 = vsyncpa [#allocation4], 0
    // Predicated region
    $region2: #{tpu_custom_call.1} parent=1 // pred_check
      _
    $region3: #{tpu_custom_call.1} parent=1 // pred_check_branch
      %12 = sbr.rel (0) target = $region5
    $region4: #{tpu_custom_call.1} parent=1 // pred_region
      %s14 = ssub.s32 128, 128
      %15 = vsyncadd [#allocation3], %s14
      %s17 = sshll.u32 [#allocation2], 4
      %s18 = int_to_ptr.vmem [resolvable:$true] %s17
      %20 = dma.hbm_to_vmem [thread:$0]  %s0, 128, %s18, [#allocation3]
    $region5: #{tpu_custom_call.1} parent=1 // pred_fallthru
      _
    // Predicated region
    $region6: #{tpu_custom_call.1} parent=1 // pred_check
      _
    $region7: #{tpu_custom_call.1} parent=1 // pred_check_branch
      %22 = sbr.rel (0) target = $region9
    $region8: #{tpu_custom_call.1} parent=1 // pred_region
      %s24 = ssub.s32 512, 512
      %25 = vsyncadd [#allocation6], %s24
      %s26 = sshll.u32 [#allocation5], 4
      %s27 = int_to_ptr.vmem [resolvable:$true] %s26
      %32 = dma.hbm_to_vmem [thread:$0]  %s1, 512, %s27, [#allocation6], 128, 128, 8
    $region9: #{tpu_custom_call.1} parent=1 // pred_fallthru
      _
    // Predicated region
    $region10: #{tpu_custom_call.1} parent=1 // pred_check
      _
    $region11: #{tpu_custom_call.1} parent=1 // pred_check_branch
      %34 = sbr.rel (0) target = $region13
    $region12: #{tpu_custom_call.1} parent=1 // pred_region
      _
    $region13: #{tpu_custom_call.1} parent=1 // pred_fallthru
      _
    // Predicated region
    $region14: #{tpu_custom_call.1} parent=1 // pred_check
      _
    $region15: #{tpu_custom_call.1} parent=1 // pred_check_branch
      %36 = sbr.rel (0) target = $region17
    $region16: #{tpu_custom_call.1} parent=1 // pred_region
      %37 = dma.done [#allocation3], 128
    $region17: #{tpu_custom_call.1} parent=1 // pred_fallthru
      _
    // Predicated region
    $region18: #{tpu_custom_call.1} parent=1 // pred_check
      _
    $region19: #{tpu_custom_call.1} parent=1 // pred_check_branch
      %39 = sbr.rel (0) target = $region21
    $region20: #{tpu_custom_call.1} parent=1 // pred_region
      %40 = dma.done [#allocation6], 512
    $region21: #{tpu_custom_call.1} parent=1 // pred_fallthru
      _
    %v41 = vld [vmem:[#allocation2] sm:$0xff]
    %v42 = vld [vmem:[#allocation5] sm:$0xff]
    %v43 = vld [vmem:[#allocation5 + $0x8] sm:$0xff]
    %v44 = vld [vmem:[#allocation5 + $0x10] sm:$0xff]
    %v45 = vld [vmem:[#allocation5 + $0x18] sm:$0xff]
    %v46 = vld [vmem:[%s2] sm:$0x1]
    %v48 = vlaneseq
    %v49 = vshrl.u32 %v48, 7
    %v50 = vsub.s32 0, %v49
    %v51 = vrot.slane %v46, %v50
    %vm53 = vcmask 261120
    %v55 = vsel %vm53, %v41, 0
    %57 = vmatprep.subr.mxu0 0.0
    %58 = vmatpush1.msra.mxu0 %v42
    %59 = vmatprep.subr.mxu0 0.0
    %60 = vmatpush1.msra.mxu0 %v43
    %61 = vmatprep.subr.mxu0 0.0
    %62 = vmatpush1.msra.mxu0 %v44
    %63 = vmatprep.subr.mxu0 0.0
    %64 = vmatpush1.msra.mxu0 %v45
    %65 = vmatprep.subr.mxu0 0.0
    %66 = vmatpush1.msra.mxu0 0.0
    %67 = vmatprep.subr.mxu0 0.0
    %68 = vmatpush1.msra.mxu0 0.0
    %69 = vmatprep.subr.mxu0 0.0
    %70 = vmatpush1.msra.mxu0 0.0
    %71 = vmatprep.subr.mxu0 0.0
    %72 = vmatpush1.msra.mxu0 0.0
    %73 = vmatprep.subr.mxu0 0.0
    %74 = vmatpush1.msra.mxu0 0.0
    %75 = vmatprep.subr.mxu0 0.0
    %76 = vmatpush1.msra.mxu0 0.0
    %77 = vmatprep.subr.mxu0 0.0
    %78 = vmatpush1.msra.mxu0 0.0
    %79 = vmatprep.subr.mxu0 0.0
    %80 = vmatpush1.msra.mxu0 0.0
    %81 = vmatprep.subr.mxu0 0.0
    %82 = vmatpush1.msra.mxu0 0.0
    %83 = vmatprep.subr.mxu0 0.0
    %84 = vmatpush1.msra.mxu0 0.0
    %85 = vmatprep.subr.mxu0 0.0
    %86 = vmatpush1.msra.mxu0 0.0
    %87 = vmatprep.subr.mxu0 0.0
    %88 = vmatpush1.msra.mxu0 0.0
    %89 = vmatprep.subr.mxu0 0.0
    %90 = vmatpush1.msra.mxu0 0.0
    %91 = vmatprep.subr.mxu0 0.0
    %92 = vmatpush1.msra.mxu0 0.0
    %93 = vmatprep.subr.mxu0 0.0
    %94 = vmatpush1.msra.mxu0 0.0
    %95 = vmatprep.subr.mxu0 0.0
    %96 = vmatpush1.msra.mxu0 0.0
    %97 = vmatprep.subr.mxu0 0.0
    %98 = vmatpush1.msra.mxu0 0.0
    %99 = vmatprep.subr.mxu0 0.0
    %100 = vmatpush1.msra.mxu0 0.0
    %101 = vmatprep.subr.mxu0 0.0
    %102 = vmatpush1.msra.mxu0 0.0
    %103 = vmatprep.subr.mxu0 0.0
    %104 = vmatpush1.msra.mxu0 0.0
    %105 = vmatprep.subr.mxu0 0.0
    %106 = vmatpush1.msra.mxu0 0.0
    %107 = vmatprep.subr.mxu0 0.0
    %108 = vmatpush1.msra.mxu0 0.0
    %109 = vmatprep.subr.mxu0 0.0
    %110 = vmatpush1.msra.mxu0 0.0
    %111 = vmatprep.subr.mxu0 0.0
    %112 = vmatpush1.msra.mxu0 0.0
    %113 = vmatprep.subr.mxu0 0.0
    %114 = vmatpush1.msra.mxu0 0.0
    %115 = vmatprep.subr.mxu0 0.0
    %116 = vmatpush1.msra.mxu0 0.0
    %117 = vmatprep.subr.mxu0 0.0
    %118 = vmatpush1.msra.mxu0 0.0
    %119 = vmatprep.subr.mxu0 0.0
    %120 = vmatpush1.msra.mxu0 0.0
    %121 = vmatprep.mubr.f32.mxu0 0.0
    %122 = vmatmul.mubr.f32.gmra.mrb[0].mxu0 %v55
    %v123 = vpop.f32.mrb[0].mxu0
    %v124 = vadd.f32 %v51, %v123
    %v125 = vpop.f32.mrb[0].mxu0
    %126 = vdwg.mxu0
    %127 = vst [vmem:[#allocation7] sm:$0xff] %v124
    // Predicated region
    $region22: #{tpu_custom_call.1} parent=1 // pred_check
      _
    $region23: #{tpu_custom_call.1} parent=1 // pred_check_branch
      %129 = sbr.rel (0) target = $region25
    $region24: #{tpu_custom_call.1} parent=1 // pred_region
      %s131 = ssub.s32 128, 128
      %132 = vsyncadd [#allocation4], %s131
      %s134 = sshll.u32 [#allocation7], 4
      %s135 = int_to_ptr.vmem [resolvable:$true] %s134
      %137 = dma.vmem_to_hbm [thread:$0]  %s135, 128, %s3, [#allocation4]
    $region25: #{tpu_custom_call.1} parent=1 // pred_fallthru
      _
    // Predicated region
    $region26: #{tpu_custom_call.1} parent=1 // pred_check
      _
    $region27: #{tpu_custom_call.1} parent=1 // pred_check_branch
      %139 = sbr.rel (0) target = $region29
    $region28: #{tpu_custom_call.1} parent=1 // pred_region
      %140 = dma.done [#allocation4], 128
    $region29: #{tpu_custom_call.1} parent=1 // pred_fallthru
      _
    %141 = vsyncpa [#allocation3], 1
    %142 = vsyncpa [#allocation6], 1
    %143 = vsyncpa [#allocation4], 1

</llo_original>
